<compile_context>
chip_gen: v5e
topology: v5e:2x2
jax: 0.10.0
libtpu: 0.0.40
codegen_flags: <defaults>
</compile_context>

<pallas_src>
import jax
import jax.numpy as jnp
from jax.experimental import pallas as pl
from jax.experimental.pallas import tpu as pltpu

_LANE = 128


def _sublane_granularity(dtype) -> int:
    # f32 -> 8, bf16 -> 16, int8/fp8 -> 32 (packed sublane rows).
    itemsize = jnp.dtype(dtype).itemsize
    return max(8, 32 // itemsize)


def _chip_config():
    """Return (target_tile_bytes_per_buffer, vmem_limit_bytes_or_None)."""
    kind = ""
    try:
        kind = jax.devices()[0].device_kind.lower()
    except Exception:
        pass
    if "v7" in kind:
        # v7x: ~3.2 TB/s HBM, 64 MiB VMEM -> 8 MiB tiles; in+out double-
        # buffered ~= 32 MiB, fits a 48 MiB scoped-VMEM limit with headroom.
        return 8 * 1024 * 1024, 48 << 20
    if "v6" in kind:
        # v6e: ~1.35 TB/s HBM, 128 MiB VMEM -> 8 MiB tiles, 64 MiB scoped.
        return 8 * 1024 * 1024, 64 << 20
    # v5e / unknown: 2 MiB tiles (8 MiB double-buffered footprint) stays well
    # under the 16 MiB default scoped VMEM; per-step overhead already <8%.
    return 2 * 1024 * 1024, None


def mul_pallas(x: jax.Array, scale: float) -> jax.Array:
    """Elementwise x * scale, computed in a Pallas TPU kernel."""
    orig_shape = x.shape
    dtype = x.dtype
    n = x.size
    if n == 0:
        return x

    itemsize = jnp.dtype(dtype).itemsize
    sub = _sublane_granularity(dtype)
    target_tile_bytes, vmem_limit = _chip_config()

    cp_kwargs = dict(dimension_semantics=("parallel",))
    if vmem_limit is not None:
        cp_kwargs["vmem_limit_bytes"] = vmem_limit
    compiler_params = pltpu.CompilerParams(**cp_kwargs)

    cost = pl.CostEstimate(
        flops=n, transcendentals=0, bytes_accessed=2 * n * itemsize
    )

    def _mul_kernel(x_ref, o_ref):
        # NOTE: with a cdiv grid the last (partial) block reads past the
        # logical extent and multiplies garbage that the masked store then
        # discards. Correct for pure elementwise work; do NOT add any
        # cross-element reduction here.
        # `scale` is a compile-time Python float folded into the VPU multiply;
        # the explicit astype guards against weak-type promotion on store.
        o_ref[...] = (x_ref[...] * scale).astype(o_ref.dtype)

    # ---- Aligned path: lane-dense 2D slab, reshape is copy-free. ----
    width = 0
    for cand in (8192, 4096, 2048, 1024, 512, 256, 128):
        if n % cand == 0:
            width = cand
            break

    if width:
        rows = n // width
        x2 = x.reshape(rows, width)

        target_rows = max(sub, target_tile_bytes // (width * itemsize))
        if rows <= target_rows:
            # Whole array fits in one tile, but prefer >=2 grid steps so both
            # v7x TensorCores can stream (never go below sublane granularity).
            half = pl.cdiv(pl.cdiv(rows, 2), sub) * sub
            block_rows = half if half < rows else rows
        else:
            block_rows = max(sub, (target_rows // sub) * sub)
            # Prefer a block-row count that divides rows exactly so the last
            # block's stores are full, unmasked vregs.
            lo = max(sub, block_rows // 2)
            for cand_rows in range(block_rows, lo - 1, -sub):
                if rows % cand_rows == 0:
                    block_rows = cand_rows
                    break

        grid = (pl.cdiv(rows, block_rows),)  # partial last block is masked
        out2 = pl.pallas_call(
            _mul_kernel,
            out_shape=jax.ShapeDtypeStruct((rows, width), dtype),
            grid=grid,
            in_specs=[pl.BlockSpec((block_rows, width), lambda i: (i, 0))],
            out_specs=pl.BlockSpec((block_rows, width), lambda i: (i, 0)),
            compiler_params=compiler_params,
            cost_estimate=cost,
        )(x2)
        return out2.reshape(orig_shape)

    # ---- Ragged path: flat 1-D array, masked partial last block. ----
    # No jnp.pad before / no slice after -> no extra HBM passes.
    x1 = x.reshape(-1)
    chunk = sub * _LANE
    target_elems = max(chunk, target_tile_bytes // itemsize)
    block_elems = (target_elems // chunk) * chunk
    if n <= block_elems:
        block_elems = n  # single full-extent block (always layout-legal)

    grid = (pl.cdiv(n, block_elems),)
    out1 = pl.pallas_call(
        _mul_kernel,
        out_shape=jax.ShapeDtypeStruct((n,), dtype),
        grid=grid,
        in_specs=[pl.BlockSpec((block_elems,), lambda i: (i,))],
        out_specs=pl.BlockSpec((block_elems,), lambda i: (i,)),
        compiler_params=compiler_params,
        cost_estimate=cost,
    )(x1)
    return out1.reshape(orig_shape)


if __name__ == "__main__":
    key = jax.random.PRNGKey(0)
    scale = 0.5  # deterministic module parameter (Mul(scale=0.5))

    # Primary test: NCHW input consistent with a small conv-net feature map.
    x = jax.random.normal(key, (2, 4, 16, 16), dtype=jnp.float32)
    y = jax.block_until_ready(mul_pallas(x, scale))
    assert y.shape == x.shape and y.dtype == x.dtype
    assert jnp.allclose(y, x * scale, atol=1e-6, rtol=1e-6)

    # Ragged-size test: exercises the 1-D masked-tail path (no pad/slice).
    x2 = jax.random.normal(key, (3, 5, 7, 11), dtype=jnp.float32)
    y2 = jax.block_until_ready(mul_pallas(x2, scale))
    assert y2.shape == x2.shape and y2.dtype == x2.dtype
    assert jnp.allclose(y2, x2 * scale, atol=1e-6, rtol=1e-6)

    # bf16 test: exercises packed-sublane granularity + explicit dtype cast.
    x3 = jax.random.normal(key, (2, 4, 16, 16), dtype=jnp.bfloat16)
    y3 = jax.block_until_ready(mul_pallas(x3, scale))
    assert y3.shape == x3.shape and y3.dtype == x3.dtype
    assert jnp.allclose(
        y3.astype(jnp.float32), x3.astype(jnp.float32) * scale, atol=1e-2, rtol=1e-2
    )

    print("KERNEL_OK")
</pallas_src>

<mosaic_0001>
module attributes {stable_mosaic.version = 11 : i64} {
  func.func @_mul_kernel(%arg0: i32, %arg1: memref<1x2048xf32, #tpu.memory_space<vmem>>, %arg2: memref<1x2048xf32, #tpu.memory_space<vmem>>) attributes {dimension_semantics = [#tpu.dimension_semantics<parallel>], iteration_bounds = array<i64: 1>, scalar_prefetch = 0 : i64, scratch_operands = 0 : i64, tpu.core_type = #tpu.core_type<tc>, window_params = [{transform_indices = @transform_0, window_bounds = array<i64: 1, 2048>}, {transform_indices = @transform_1, window_bounds = array<i64: 1, 2048>}]} {
    %c0 = arith.constant 0 : index
    %c0_0 = arith.constant 0 : index
    %0 = vector.load %arg1[%c0, %c0_0] : memref<1x2048xf32, #tpu.memory_space<vmem>>, vector<1x2048xf32>
    %cst = arith.constant 5.000000e-01 : f32
    %1 = vector.broadcast %cst : f32 to vector<1x2048xf32>
    %2 = arith.mulf %0, %1 : vector<1x2048xf32>
    %c0_1 = arith.constant 0 : index
    %c0_2 = arith.constant 0 : index
    %3 = vector.load %arg2[%c0_1, %c0_2] : memref<1x2048xf32, #tpu.memory_space<vmem>>, vector<1x2048xf32>
    tpu.vector_store %arg2[%c0_1, %c0_2], %2 {strides = array<i32>} : memref<1x2048xf32, #tpu.memory_space<vmem>>, vector<1x2048xf32>,
    return
  }
  func.func @transform_0(%arg0: i32) -> (i32, i32) {
    %c0_i32 = arith.constant 0 : i32
    %c0_i32_0 = arith.constant 0 : i32
    return %arg0, %c0_i32 : i32, i32
  }
  func.func @transform_1(%arg0: i32) -> (i32, i32) {
    %c0_i32 = arith.constant 0 : i32
    %c0_i32_0 = arith.constant 0 : i32
    return %arg0, %c0_i32 : i32, i32
  }
}

</mosaic_0001>

<llo_original>
// kernel: tpu_custom_call.1
$region0: #{tpu_custom_call.1}
  #allocation0 [shape = 'u32[]', space=smem, size = 0x4, offset = 0x4, fixed_abs, tag = 'smem constant byte address 0x4 - core index']
  #allocation1 [shape = 'u32[72,128]{1,0:T(1,128)}', space=vmem, size = 0x9000, scoped, tag = 'internal scratch']
  %s0 = inlined_call_operand.hbm [shape: f32[1,2048], index: 0, kind: input, shape index: {}]
  %s1 = inlined_call_operand.hbm [shape: f32[1,2048], index: 1, kind: output, shape index: {}]
  %s2 = sld [smem:[#allocation0]]
  $region18: #{tpu_custom_call.1} parent=0
    _
  %s4 = ssub.s32 1, %s2
  %s5 = scalar_select 0, %s4, %s2
  $region1: #{tpu_custom_call.1} parent=0
    #allocation2 [shape = 'u8[8192]{0}', space=vmem, size = 0x2000, scoped, tag = 'input window, operand 0, single buffered']
    #allocation3 [shape = 's32[1]{0}', space=sflag, size = 0x4, scoped, tag = 'scoped memory for tpu_custom_call.1']
    #allocation4 [shape = 's32[1]{0}', space=sflag, size = 0x4, scoped, tag = 'scoped memory for tpu_custom_call.1']
    #allocation5 [shape = 'u8[8192]{0}', space=vmem, size = 0x2000, scoped, tag = 'output window, operand 0, single buffered']
    %6 = vsyncpa [#allocation3], 0
    %7 = vsyncpa [#allocation4], 0
    // Predicated region
    $region2: #{tpu_custom_call.1} parent=1 // pred_check
      _
    $region3: #{tpu_custom_call.1} parent=1 // pred_check_branch
      %9 = sbr.rel (0) target = $region5
    $region4: #{tpu_custom_call.1} parent=1 // pred_region
      %11 = vsyncadd [#allocation3], 0
      %s13 = sshll.u32 %s0, 4
      %s14 = int_to_ptr.hbm [resolvable:$true] %s13
      %s15 = sshll.u32 [#allocation2], 4
      %s16 = int_to_ptr.vmem [resolvable:$true] %s15
      %18 = dma.hbm_to_vmem [thread:$0]  %s14, 256, %s16, [#allocation3]
    $region5: #{tpu_custom_call.1} parent=1 // pred_fallthru
      _
    // Predicated region
    $region6: #{tpu_custom_call.1} parent=1 // pred_check
      _
    $region7: #{tpu_custom_call.1} parent=1 // pred_check_branch
      %20 = sbr.rel (0) target = $region9
    $region8: #{tpu_custom_call.1} parent=1 // pred_region
      %22 = dma.done [#allocation3], 256
    $region9: #{tpu_custom_call.1} parent=1 // pred_fallthru
      _
    %v23 = vld [vmem:[#allocation2] sm:$0xff]
    %v24 = vld [vmem:[#allocation2 + $0x8] sm:$0xff]
    %v25 = vmul.f32 %v23, 0.5
    %v26 = vmul.f32 %v24, 0.5
    %27 = vst [vmem:[#allocation5] sm:$0xff] %v25
    %28 = vst [vmem:[#allocation5 + $0x8] sm:$0xff] %v26
    // Predicated region
    $region10: #{tpu_custom_call.1} parent=1 // pred_check
      _
    $region11: #{tpu_custom_call.1} parent=1 // pred_check_branch
      %30 = sbr.rel (0) target = $region13
    $region12: #{tpu_custom_call.1} parent=1 // pred_region
      %32 = vsyncadd [#allocation4], 0
      %s34 = sshll.u32 [#allocation5], 4
      %s35 = int_to_ptr.vmem [resolvable:$true] %s34
      %s36 = sshll.u32 %s1, 4
      %s37 = int_to_ptr.hbm [resolvable:$true] %s36
      %39 = dma.vmem_to_hbm [thread:$0]  %s35, 256, %s37, [#allocation4]
    $region13: #{tpu_custom_call.1} parent=1 // pred_fallthru
      _
    // Predicated region
    $region14: #{tpu_custom_call.1} parent=1 // pred_check
      _
    $region15: #{tpu_custom_call.1} parent=1 // pred_check_branch
      %41 = sbr.rel (0) target = $region17
    $region16: #{tpu_custom_call.1} parent=1 // pred_region
      %43 = dma.done [#allocation4], 256
    $region17: #{tpu_custom_call.1} parent=1 // pred_fallthru
      _
    %44 = vsyncpa [#allocation3], 1
    %45 = vsyncpa [#allocation4], 1

</llo_original>
